<compile_context>
chip_gen: v6e
topology: v6e:2x2x1
jax: 0.10.0
libtpu: 0.0.40
codegen_flags: <defaults>
</compile_context>

<pallas_src>
import functools

import jax
import jax.numpy as jnp
from jax.experimental import pallas as pl
from jax.experimental.pallas import tpu as pltpu


def _prompt_embed_kernel(
    flag_ref,       # SMEM (1,)  int32   : global "do replacement" gate
    tok_ref,        # SMEM (B,S) int32   : token ids (scalar prefetch)
    wte_ref,        # ANY/HBM (V, D)     : embedding table (never in VMEM)
    learned_ref,    # VMEM (T, D)        : learned prompt embeddings
    out_ref,        # VMEM (tS, D)       : output block (batch dim squeezed)
    gbuf,           # VMEM scratch (tS, D): gathered wte rows
    copy_sems,      # DMA semaphores (tS,)
    cnt_ref,        # SMEM scratch (1,) int32 : running prompt count per row
    *, prompt_token_id, T, tS):
    b = pl.program_id(0)
    st = pl.program_id(1)
    s0 = st * tS

    # ---- (1) embedding gather: one row DMA per position, wte[tok] -> gbuf --
    @pl.loop(0, tS)
    def _issue(i):
        tid = tok_ref[b, s0 + i]
        pltpu.make_async_copy(wte_ref.at[pl.ds(tid, 1)],
                              gbuf.at[pl.ds(i, 1)],
                              copy_sems.at[i]).start()

    @pl.loop(0, tS)
    def _wait(i):
        pltpu.make_async_copy(wte_ref.at[pl.ds(0, 1)],
                              gbuf.at[pl.ds(i, 1)],
                              copy_sems.at[i]).wait()

    out_ref[...] = gbuf[...].astype(out_ref.dtype)

    # ---- (2) running prompt-position counter, reset per batch row ----------
    @pl.when(st == 0)
    def _():
        cnt_ref[0] = 0

    # ---- (3) soft-prompt substitution, only when the global gate is on -----
    @pl.when(flag_ref[0] != 0)
    def _():
        @pl.loop(0, tS)
        def _replace(i):
            tid = tok_ref[b, s0 + i]
            is_p = tid == prompt_token_id
            cnt = cnt_ref[0]

            @pl.when(jnp.logical_and(is_p, cnt < T))
            def _():
                out_ref[pl.ds(i, 1), :] = learned_ref[pl.ds(cnt, 1), :]

            cnt_ref[0] = cnt + is_p.astype(jnp.int32)


def prompt_embedding_forward(tokens, wte_weight, learned_embedding,
                             prompt_token_id, *, seq_tile=None):
    """tokens: [B, S] int; wte_weight: [V, D]; learned_embedding: [T, D]."""
    B, S = tokens.shape
    V, D = wte_weight.shape
    T = learned_embedding.shape[0]

    if seq_tile is None:
        seq_tile = S
        for cand in (512, 256, 128, 64, 32, 16, 8):
            if S % cand == 0:
                seq_tile = cand
                break
    assert S % seq_tile == 0, "seq_tile must divide S"
    tS = seq_tile

    # Global gate, same early-return logic as the PyTorch forward: replace
    # only if the batch-wide prompt-token count is > 0 and >= sum(n_tokens).
    n_prompt = jnp.sum(tokens == prompt_token_id)
    flag = jnp.logical_and(n_prompt > 0, n_prompt >= T)
    flag = flag.astype(jnp.int32).reshape((1,))

    tokens = tokens.astype(jnp.int32)
    learned_embedding = learned_embedding.astype(wte_weight.dtype)

    kernel = functools.partial(_prompt_embed_kernel,
                               prompt_token_id=int(prompt_token_id),
                               T=T, tS=tS)

    out = pl.pallas_call(
        kernel,
        out_shape=jax.ShapeDtypeStruct((B, S, D), wte_weight.dtype),
        grid_spec=pltpu.PrefetchScalarGridSpec(
            num_scalar_prefetch=2,              # flag, tokens -> SMEM
            grid=(B, S // tS),
            in_specs=[
                pl.BlockSpec(memory_space=pl.ANY),                      # wte (HBM)
                pl.BlockSpec((T, D), lambda b, st, flag, tok: (0, 0)),  # learned
            ],
            out_specs=pl.BlockSpec((None, tS, D),
                                   lambda b, st, flag, tok: (b, st, 0)),
            scratch_shapes=[
                pltpu.VMEM((tS, D), wte_weight.dtype),   # gathered rows
                pltpu.SemaphoreType.DMA((tS,)),          # one sem per row DMA
                pltpu.SMEM((1,), jnp.int32),             # running prompt count
            ],
        ),
        compiler_params=pltpu.CompilerParams(
            dimension_semantics=("parallel", "arbitrary")),
    )(flag, tokens, wte_weight, learned_embedding)
    return out


def _reference(tokens, wte_weight, learned_embedding, prompt_token_id):
    T = learned_embedding.shape[0]
    base = wte_weight[tokens]                                       # (B, S, D)
    is_p = tokens == prompt_token_id
    prefix = jnp.cumsum(is_p.astype(jnp.int32), axis=1) - is_p.astype(jnp.int32)
    repl = learned_embedding[jnp.minimum(prefix, T - 1)]            # (B, S, D)
    n_prompt = jnp.sum(is_p)
    gate = jnp.logical_and(n_prompt > 0, n_prompt >= T)
    mask = is_p & (prefix < T) & gate
    return jnp.where(mask[..., None], repl, base)


if __name__ == "__main__":
    # Small synthetic configuration consistent with the module.
    B, S, D, V = 2, 16, 128, 512          # D multiple of 128 -> lane-dense out
    n_tokens = (3, 3, 2)                  # sum = 8 learned prompt tokens
    T = sum(n_tokens)
    prompt_token_id = V - 1               # id 511 reserved for the prompt marker

    key = jax.random.PRNGKey(0)
    k_wte, k_tok = jax.random.split(key)

    # Deterministic parameter init (synthetic, no checkpoint).
    wte_weight = jax.random.normal(k_wte, (V, D), dtype=jnp.float32)
    initialize_tokens = jnp.arange(T, dtype=jnp.int32) % V
    learned_embedding = wte_weight[initialize_tokens]               # (T, D)

    # Tokens: random ids in [0, V-1) so they never collide with the prompt id,
    # then exactly T prompt markers per row (as the PyTorch reshape requires).
    tokens = jax.random.randint(k_tok, (B, S), 0, V - 1, dtype=jnp.int32)
    tokens = tokens.at[0, jnp.arange(1, 1 + 2 * T, 2)].set(prompt_token_id)
    tokens = tokens.at[1, jnp.arange(0, 2 * T, 2)].set(prompt_token_id)

    # seq_tile=8 -> 2 sequence tiles per row; exercises the cross-tile counter.
    out = prompt_embedding_forward(tokens, wte_weight, learned_embedding,
                                   prompt_token_id, seq_tile=8)
    out = jax.block_until_ready(out)
    ref = _reference(tokens, wte_weight, learned_embedding, prompt_token_id)
    assert out.shape == (B, S, D)
    assert jnp.allclose(out, ref), "mismatch on the replacement path"

    # Gate-off path: no prompt tokens -> plain embedding lookup is returned.
    tokens_off = jnp.where(tokens == prompt_token_id, 1, tokens)
    out2 = prompt_embedding_forward(tokens_off, wte_weight, learned_embedding,
                                    prompt_token_id, seq_tile=8)
    out2 = jax.block_until_ready(out2)
    ref2 = _reference(tokens_off, wte_weight, learned_embedding, prompt_token_id)
    assert jnp.allclose(out2, ref2), "mismatch on the early-return path"

    print("KERNEL_OK")
</pallas_src>

<mosaic_0001>
module attributes {stable_mosaic.version = 11 : i64} {
  func.func @_prompt_embed_kernel(%arg0: i32, %arg1: i32, %arg2: memref<1xi32, #tpu.memory_space<smem>>, %arg3: memref<2x16xi32, #tpu.memory_space<smem>>, %arg4: memref<512x128xf32, #tpu.memory_space<any>>, %arg5: memref<8x128xf32, #tpu.memory_space<vmem>>, %arg6: memref<1x8x128xf32, #tpu.memory_space<vmem>>, %arg7: memref<8x128xf32, #tpu.memory_space<vmem>>, %arg8: memref<8x!tpu.dma_semaphore, #tpu.memory_space<semaphore_mem>>, %arg9: memref<1xi32, #tpu.memory_space<smem>>) attributes {dimension_semantics = [#tpu.dimension_semantics<parallel>, #tpu.dimension_semantics<arbitrary>], iteration_bounds = array<i64: 2, 2>, scalar_prefetch = 2 : i64, scratch_operands = 3 : i64, tpu.core_type = #tpu.core_type<tc>, window_params = [{}, {pipeline_mode = #tpu.pipeline_mode<synchronous>, transform_indices = @transform_1, window_bounds = array<i64: 8, 128>}, {transform_indices = @transform_2, window_bounds = array<i64: 1, 8, 128>}]} {
    %c8_i32 = arith.constant 8 : i32
    %0 = arith.muli %arg1, %c8_i32 : i32
    %c0_i32 = arith.constant 0 : i32
    %c8_i32_0 = arith.constant 8 : i32
    %1 = arith.addi %c0_i32, %c8_i32_0 : i32
    %c1_i32 = arith.constant 1 : i32
    scf.for %arg10 = %c0_i32 to %1 step %c1_i32  : i32 {
      %c1_i32_15 = arith.constant 1 : i32
      %14 = arith.muli %arg10, %c1_i32_15 : i32
      %c0_i32_16 = arith.constant 0 : i32
      %15 = arith.addi %c0_i32_16, %14 : i32
      %16 = arith.addi %0, %15 : i32
      %17 = arith.index_cast %arg0 : i32 to index
      %18 = arith.index_cast %16 : i32 to index
      %19 = memref.load %arg3[%17, %18] : memref<2x16xi32, #tpu.memory_space<smem>>
      %c0_i32_17 = arith.constant 0 : i32
      %20 = tpu.memref_slice %arg4[%19, %c0_i32_17] : memref<512x128xf32, #tpu.memory_space<any>> -> memref<1x128xf32, #tpu.memory_space<any>>
      %c0_i32_18 = arith.constant 0 : i32
      %21 = tpu.memref_slice %arg7[%15, %c0_i32_18] : memref<8x128xf32, #tpu.memory_space<vmem>> -> memref<1x128xf32, #tpu.memory_space<vmem>>
      %22 = tpu.memref_slice %arg8[%15] : memref<8x!tpu.dma_semaphore, #tpu.memory_space<semaphore_mem>> -> memref<1x!tpu.dma_semaphore, #tpu.memory_space<semaphore_mem>>
      %23 = tpu.memref_squeeze %22 : memref<1x!tpu.dma_semaphore, #tpu.memory_space<semaphore_mem>> -> memref<!tpu.dma_semaphore, #tpu.memory_space<semaphore_mem>>
      tpu.enqueue_dma source(%20 : memref<1x128xf32, #tpu.memory_space<any>>) target(%21 : memref<1x128xf32, #tpu.memory_space<vmem>>) target_semaphore(%23 : memref<!tpu.dma_semaphore, #tpu.memory_space<semaphore_mem>>)
    }
    %c8_i32_1 = arith.constant 8 : i32
    %c0_i32_2 = arith.constant 0 : i32
    %c8_i32_3 = arith.constant 8 : i32
    %2 = arith.addi %c0_i32_2, %c8_i32_3 : i32
    %c1_i32_4 = arith.constant 1 : i32
    scf.for %arg10 = %c0_i32_2 to %2 step %c1_i32_4  : i32 {
      %c1_i32_15 = arith.constant 1 : i32
      %14 = arith.muli %arg10, %c1_i32_15 : i32
      %c0_i32_16 = arith.constant 0 : i32
      %15 = arith.addi %c0_i32_16, %14 : i32
      %c0_i32_17 = arith.constant 0 : i32
      %c0_i32_18 = arith.constant 0 : i32
      %16 = tpu.memref_slice %arg4[%c0_i32_17, %c0_i32_18] : memref<512x128xf32, #tpu.memory_space<any>> -> memref<1x128xf32, #tpu.memory_space<any>>
      %c0_i32_19 = arith.constant 0 : i32
      %17 = tpu.memref_slice %arg7[%15, %c0_i32_19] : memref<8x128xf32, #tpu.memory_space<vmem>> -> memref<1x128xf32, #tpu.memory_space<vmem>>
      %18 = tpu.memref_slice %arg8[%15] : memref<8x!tpu.dma_semaphore, #tpu.memory_space<semaphore_mem>> -> memref<1x!tpu.dma_semaphore, #tpu.memory_space<semaphore_mem>>
      %19 = tpu.memref_squeeze %18 : memref<1x!tpu.dma_semaphore, #tpu.memory_space<semaphore_mem>> -> memref<!tpu.dma_semaphore, #tpu.memory_space<semaphore_mem>>
      tpu.wait_dma2 semaphore(%19 : memref<!tpu.dma_semaphore, #tpu.memory_space<semaphore_mem>>) src(%16 : memref<1x128xf32, #tpu.memory_space<any>>) dst(%17 : memref<1x128xf32, #tpu.memory_space<vmem>>)
    }
    %c8_i32_5 = arith.constant 8 : i32
    %c0 = arith.constant 0 : index
    %c0_6 = arith.constant 0 : index
    %3 = vector.load %arg7[%c0, %c0_6] : memref<8x128xf32, #tpu.memory_space<vmem>>, vector<8x128xf32>
    %c0_7 = arith.constant 0 : index
    %c0_8 = arith.constant 0 : index
    %c0_9 = arith.constant 0 : index
    %4 = vector.load %arg6[%c0_7, %c0_8, %c0_9] : memref<1x8x128xf32, #tpu.memory_space<vmem>>, vector<1x8x128xf32>
    %5 = vector.shape_cast %4 : vector<1x8x128xf32> to vector<8x128xf32>
    %6 = vector.shape_cast %3 : vector<8x128xf32> to vector<1x8x128xf32>
    tpu.vector_store %arg6[%c0_7, %c0_8, %c0_9], %6 {strides = array<i32>} : memref<1x8x128xf32, #tpu.memory_space<vmem>>, vector<1x8x128xf32>,
    %c0_i32_10 = arith.constant 0 : i32
    %7 = arith.cmpi eq, %arg1, %c0_i32_10 : i32
    %8 = arith.extui %7 : i1 to i32
    %c0_i32_11 = arith.constant 0 : i32
    %9 = arith.cmpi ne, %8, %c0_i32_11 : i32
    scf.if %9 {
      %c0_i32_15 = arith.constant 0 : i32
      %c0_16 = arith.constant 0 : index
      %14 = memref.load %arg9[%c0_16] : memref<1xi32, #tpu.memory_space<smem>>
      memref.store %c0_i32_15, %arg9[%c0_16] : memref<1xi32, #tpu.memory_space<smem>>
    } else {
    }
    %c0_12 = arith.constant 0 : index
    %10 = memref.load %arg2[%c0_12] : memref<1xi32, #tpu.memory_space<smem>>
    %c0_i32_13 = arith.constant 0 : i32
    %11 = arith.cmpi ne, %10, %c0_i32_13 : i32
    %12 = arith.extui %11 : i1 to i32
    %c0_i32_14 = arith.constant 0 : i32
    %13 = arith.cmpi ne, %12, %c0_i32_14 : i32
    scf.if %13 {
      %c0_i32_15 = arith.constant 0 : i32
      %c8_i32_16 = arith.constant 8 : i32
      %14 = arith.addi %c0_i32_15, %c8_i32_16 : i32
      %c1_i32_17 = arith.constant 1 : i32
      scf.for %arg10 = %c0_i32_15 to %14 step %c1_i32_17  : i32 {
        %c1_i32_19 = arith.constant 1 : i32
        %15 = arith.muli %arg10, %c1_i32_19 : i32
        %c0_i32_20 = arith.constant 0 : i32
        %16 = arith.addi %c0_i32_20, %15 : i32
        %17 = arith.addi %0, %16 : i32
        %18 = arith.index_cast %arg0 : i32 to index
        %19 = arith.index_cast %17 : i32 to index
        %20 = memref.load %arg3[%18, %19] : memref<2x16xi32, #tpu.memory_space<smem>>
        %c511_i32 = arith.constant 511 : i32
        %21 = arith.cmpi eq, %20, %c511_i32 : i32
        %c0_21 = arith.constant 0 : index
        %22 = memref.load %arg9[%c0_21] : memref<1xi32, #tpu.memory_space<smem>>
        %c8_i32_22 = arith.constant 8 : i32
        %23 = arith.cmpi slt, %22, %c8_i32_22 : i32
        %24 = arith.andi %21, %23 : i1
        %25 = arith.extui %24 : i1 to i32
        %c0_i32_23 = arith.constant 0 : i32
        %26 = arith.cmpi ne, %25, %c0_i32_23 : i32
        scf.if %26 {
          %30 = arith.index_cast %22 : i32 to index
          %c0_25 = arith.constant 0 : index
          %31 = vector.load %arg5[%30, %c0_25] : memref<8x128xf32, #tpu.memory_space<vmem>>, vector<1x128xf32>
          %c0_26 = arith.constant 0 : index
          %32 = arith.index_cast %16 : i32 to index
          %c0_27 = arith.constant 0 : index
          %33 = vector.load %arg6[%c0_26, %32, %c0_27] : memref<1x8x128xf32, #tpu.memory_space<vmem>>, vector<1x1x128xf32>
          %34 = vector.shape_cast %33 : vector<1x1x128xf32> to vector<1x128xf32>
          %35 = vector.shape_cast %31 : vector<1x128xf32> to vector<1x1x128xf32>
          tpu.vector_store %arg6[%c0_26, %32, %c0_27], %35 {strides = array<i32>} : memref<1x8x128xf32, #tpu.memory_space<vmem>>, vector<1x1x128xf32>,
        } else {
        }
        %27 = arith.extui %21 : i1 to i32
        %28 = arith.addi %22, %27 : i32
        %c0_24 = arith.constant 0 : index
        %29 = memref.load %arg9[%c0_24] : memref<1xi32, #tpu.memory_space<smem>>
        memref.store %28, %arg9[%c0_24] : memref<1xi32, #tpu.memory_space<smem>>
      }
      %c8_i32_18 = arith.constant 8 : i32
    } else {
    }
    return
  }
  func.func @transform_1(%arg0: i32, %arg1: i32, %arg2: memref<1xi32, #tpu.memory_space<smem>>, %arg3: memref<2x16xi32, #tpu.memory_space<smem>>) -> (i32, i32) {
    %c0_i32 = arith.constant 0 : i32
    %c0_i32_0 = arith.constant 0 : i32
    %c0_i32_1 = arith.constant 0 : i32
    return %c0_i32, %c0_i32_0 : i32, i32
  }
  func.func @transform_2(%arg0: i32, %arg1: i32, %arg2: memref<1xi32, #tpu.memory_space<smem>>, %arg3: memref<2x16xi32, #tpu.memory_space<smem>>) -> (i32, i32, i32) {
    %c0_i32 = arith.constant 0 : i32
    %c0_i32_0 = arith.constant 0 : i32
    return %arg0, %arg1, %c0_i32 : i32, i32, i32
  }
}

</mosaic_0001>

<llo_original>
// kernel: tpu_custom_call.1
$region0: #{tpu_custom_call.1}
  #allocation0 [shape = 'u32[]', space=smem, size = 0x4, offset = 0x4, fixed_abs, tag = 'smem constant byte address 0x4 - core index']
  #allocation1 [shape = 'u32[144,128]{1,0:T(1,128)}', space=vmem, size = 0x12000, scoped, tag = 'internal scratch']
  #allocation2 [shape = 'f32[8,128]{1,0:T(8,128)}', space=vmem, size = 0x1000, scoped, tag = 'scratch operand']
  #allocation3 [shape = 's32[8]{0}', space=sflag, size = 0x20, scoped, tag = 'scratch operand']
  #allocation4 [shape = 's32[1]{0:T(128)}', space=smem, size = 0x200, scoped, tag = 'scratch operand']
  #allocation5 [shape = 's32[1]{0}', space=sflag, size = 0x4, scoped, tag = 'scoped memory for tpu_custom_call.1']
  #allocation6 [shape = 's32[1]{0:T(128)S(6)}', space=smem, size = 0x200, scoped, tag = 'prefetched SMEM operand 0']
  #allocation7 [shape = 'u8[1024]{0}', space=smem, size = 0x400, scoped, tag = 'prefetched SMEM operand 1']
  #allocation12 [shape = 's32[]', space=sflag, size = 0x4, offset = 0, fixed_abs, tag = 'sflag constant byte address 0x0 - dummy sync flag']
  #allocation13 [shape = 's32[]', space=sflag, size = 0x4, offset = 0, fixed_abs, tag = 'sflag constant byte address 0x0 - dummy sync flag']
  #allocation14 [shape = 'u32[]', space=smem, size = 0x4, offset = 0x44, fixed_abs, tag = 'smem constant byte address 0x44 - assertion arg 0']
  #allocation15 [shape = 'u32[]', space=smem, size = 0x4, offset = 0x48, fixed_abs, tag = 'smem constant byte address 0x48 - assertion arg 1']
  %s0 = inlined_call_operand.<no memory space> [shape: s32[1], index: 0, kind: input, shape index: {}]
  %s1 = inlined_call_operand.vmem [shape: s32[2,16], index: 1, kind: input, shape index: {}]
  %s2 = inlined_call_operand.hbm [shape: f32[512,128], index: 2, kind: input, shape index: {}]
  %s3 = inlined_call_operand.hbm [shape: f32[8,128], index: 3, kind: input, shape index: {}]
  %s4 = inlined_call_operand.hbm [shape: f32[2,16,128], index: 4, kind: output, shape index: {}]
  %s5 = sld [smem:[#allocation0]]
  $region78: #{tpu_custom_call.1} parent=0
    _
  %s7 = ssub.s32 1, %s5
  %s8 = scalar_select 0, %s7, %s5
  %9 = sst [smem:[#allocation6]] %s0
  %s10 = sshll.u32 %s1, 4
  %s11 = int_to_ptr.vmem [resolvable:$true] %s10
  %13 = dma.vmem_to_smem %s11, 32, [#allocation7], [#allocation5]
  %14 = dma.done [#allocation5], 32
  %15 = sfence
  $region1: #{tpu_custom_call.1} parent=0
    #allocation8 [shape = 'u8[4096]{0}', space=vmem, size = 0x1000, scoped, tag = 'input window, operand 3, single buffered']
    #allocation9 [shape = 's32[2]{0}', space=sflag, size = 0x8, scoped, tag = 'scoped memory for tpu_custom_call.1']
    #allocation10 [shape = 's32[2]{0}', space=sflag, size = 0x8, scoped, tag = 'scoped memory for tpu_custom_call.1']
    #allocation11 [shape = 'u8[8192]{0}', space=vmem, size = 0x2000, scoped, tag = 'output window, operand 0']
    %16 = vsyncpa [#allocation9], 0
    %17 = vsyncpa [#allocation10], 0
    %s18 = scalar_lea.sflag [#allocation10], 1
    %19 = vsyncpa %s18, 0
    loop: start=0, step=1, limit=6
    $region2: #{tpu_custom_call.1} parent=1 // loop_pre_header
      _
    $region3: #{tpu_custom_call.1} parent=1 // loop_header
      %s21 = sphi 0, %s25
      %p22 = scmp.ge.s32.totalorder %s21, 6
      %s28 = sphi 0, %s40
      %s29 = sphi 0, %s36
      %s30 = sphi 0, %s28
      %s31 = sphi 0, %s29
      %s32 = sphi 0, %s30
      %s33 = sphi 0, %s31
      %s41 = sphi 0, %s41
      %s43 = sphi 0, %s41
      %s44 = sphi 0, %s43
      %s58 = sphi 0, %s44
      %s66 = sphi 0, %s68
      %s69 = sphi 0, %s66
      %s70 = sphi 0, %s69
      %s86 = sphi 0, %s70
    $region4: #{tpu_custom_call.1} parent=1 // loop_header_branch
      %24 = sbr.rel (%p22) target = $region8
    $region5: #{tpu_custom_call.1} parent=1 // loop_body
      %s26 = ssub.s32 %s21, 1
      %s27 = ssub.s32 %s21, 2
      %s34 = sadd.s32 1, %s29
      %p35 = scmp.ge.s32.totalorder %s34, 2
      %s36 = scalar_select %p35, 0, %s34
      %s37 = sadd.s32 1, %s28
      %s38 = scalar_select %p35, %s37, %s28
      %p39 = scmp.ge.s32.totalorder %s38, 2
      %s40 = scalar_select %p39, 0, %s38
      %s42 = sadd.s32 %s41, 1
      %p45 = scmp.eq.s32.totalorder %s21, 3
      %p46 = scmp.ne.s32.totalorder %s41, %s43
      %p47 = scmp.eq.s32.totalorder %s21, 0
      %p48 = por %p46, %p47
      %p49 = scmp.ne.s32.totalorder %s41, %s43
      %p50 = scmp.eq.s32.totalorder %s26, 3
      %p51 = por %p49, %p50
      %p52 = scmp.ne.s32.totalorder %s43, %s44
      %p53 = scmp.eq.s32.totalorder %s26, 0
      %p54 = por %p52, %p53
      %p55 = scmp.ne.s32.totalorder %s43, %s44
      %p56 = scmp.eq.s32.totalorder %s27, 3
      %p57 = por %p55, %p56
      %p59 = scmp.ne.s32.totalorder %s44, %s58
      %p60 = scmp.eq.s32.totalorder %s27, 0
      %p61 = por %p59, %p60
      %s62 = ssub.s32 %s28, %s40
      %s63 = ssub.s32 %s29, %s36
      %s64 = sor.u32 %s62, %s63
      %p65 = scmp.eq.s32.totalorder %s64, 0
      %s67 = sadd.s32 %s66, 1
      %s68 = scalar_select %p65, %s66, %s67
      %p71 = pneg %p65
      %p72 = scmp.eq.s32.totalorder %s21, 3
      %p73 = por %p71, %p72
      %p74 = scmp.ne.s32.totalorder %s66, %s69
      %p75 = scmp.eq.s32.totalorder %s21, 0
      %p76 = por %p74, %p75
      %p77 = scmp.ne.s32.totalorder %s66, %s69
      %p78 = scmp.eq.s32.totalorder %s26, 3
      %p79 = por %p77, %p78
      %p80 = scmp.ne.s32.totalorder %s69, %s70
      %p81 = scmp.eq.s32.totalorder %s26, 0
      %p82 = por %p80, %p81
      %p83 = scmp.ne.s32.totalorder %s69, %s70
      %p84 = scmp.eq.s32.totalorder %s27, 3
      %p85 = por %p83, %p84
      %p87 = scmp.ne.s32.totalorder %s70, %s86
      %p88 = scmp.eq.s32.totalorder %s27, 0
      %p89 = por %p87, %p88
      %p90 = scmp.le.s32.totalorder 1, %s21
      %p91 = scmp.lt.s32.totalorder %s21, 5
      %p92 = pnand %p90, %p91
      %p93 = pneg %p92
      // Predicated region
      $region9: #{tpu_custom_call.1} parent=5 // pred_check
        _
      $region10: #{tpu_custom_call.1} parent=5 // pred_check_branch
        %95 = sbr.rel (%p92) target = $region12
      $region11: #{tpu_custom_call.1} parent=5 // pred_region
        %s96 = ssub.s32 %s21, 1
        // Predicated region
        $region13: #{tpu_custom_call.1} parent=11 // pred_check
          %p97 = pneg %p54
        $region14: #{tpu_custom_call.1} parent=11 // pred_check_branch
          %99 = sbr.rel (%p97) target = $region16
        $region15: #{tpu_custom_call.1} parent=11 // pred_region
          %s101 = ssub.s32 128, 128
          %102 = vsyncadd [#allocation9], %s101
          %s104 = sshll.u32 [#allocation8], 4
          %s105 = int_to_ptr.vmem [resolvable:$true] %s104
          %107 = dma.hbm_to_vmem [thread:$0]  %s3, 128, %s105, [#allocation9]
        $region16: #{tpu_custom_call.1} parent=11 // pred_fallthru
          _
      $region12: #{tpu_custom_call.1} parent=5 // pred_fallthru
        _
      %p108 = scmp.lt.s32.totalorder %s21, 4
      // Predicated region
      $region17: #{tpu_custom_call.1} parent=5 // pred_check
        %p109 = pneg %p108
      $region18: #{tpu_custom_call.1} parent=5 // pred_check_branch
        %111 = sbr.rel (%p109) target = $region20
      $region19: #{tpu_custom_call.1} parent=5 // pred_region
        _
      $region20: #{tpu_custom_call.1} parent=5 // pred_fallthru
        _
      %p112 = scmp.le.s32.totalorder 1, %s21
      %p113 = scmp.lt.s32.totalorder %s21, 5
      %p114 = pnand %p112, %p113
      %p115 = pneg %p114
      // Predicated region
      $region21: #{tpu_custom_call.1} parent=5 // pred_check
        _
      $region22: #{tpu_custom_call.1} parent=5 // pred_check_branch
        %117 = sbr.rel (%p114) target = $region24
      $region23: #{tpu_custom_call.1} parent=5 // pred_region
        %s118 = ssub.s32 %s21, 1
        // Predicated region
        $region25: #{tpu_custom_call.1} parent=23 // pred_check
          %p119 = pneg %p54
        $region26: #{tpu_custom_call.1} parent=23 // pred_check_branch
          %121 = sbr.rel (%p119) target = $region28
        $region27: #{tpu_custom_call.1} parent=23 // pred_region
          %122 = dma.done [#allocation9], 128
        $region28: #{tpu_custom_call.1} parent=23 // pred_fallthru
          _
        %p123 = pneg %p54
        %p124 = pneg %p51
        %p125 = pneg %p82
        %p126 = pneg %p79
        %s127 = sand.u32 %s69, 1
        %s128 = scalar_lea.sflag [#allocation10], %s127
        %s129 = sand.u32 %s69, 1
        %s130 = smul.addr %s129, 8
        %s131 = scalar_lea.vmem [#allocation11], %s130
        %s132 = smul.u32 %s31, 8
        loop: start=0, step=1, limit=8
        $region29: #{tpu_custom_call.1} parent=23 // loop_pre_header
          _
        $region30: #{tpu_custom_call.1} parent=23 // loop_header
          %s134 = sphi 0, %s138
          %p135 = scmp.ge.s32.totalorder %s134, 8
        $region31: #{tpu_custom_call.1} parent=23 // loop_header_branch
          %137 = sbr.rel (%p135) target = $region35
        $region32: #{tpu_custom_call.1} parent=23 // loop_body
          %s139 = sadd.s32 %s132, %s134
          %s140 = sshra.s32 %s139, 7
          %s141 = sand.u32 %s139, 127
          %s142 = sadd.s32 %s140, %s30
          %s143 = smul.u32 %s142, 128
          %s144 = sshra.s32 %s139, 7
          %s145 = sand.u32 %s139, 127
          %s146 = sadd.s32 %s143, %s145
          %s147 = sld [smem:[#allocation7 + %s146]]
          %s148 = smul.addr %s147, 16
          %s149 = scalar_lea.hbm %s2, %s148
          %s150 = scalar_lea.vmem [#allocation2], %s134
          %s151 = scalar_lea.sflag [#allocation3], %s134
          // Predicated region
          $region36: #{tpu_custom_call.1} parent=32 // pred_check
            _
          $region37: #{tpu_custom_call.1} parent=32 // pred_check_branch
            %153 = sbr.rel target = $region39
          $region38: #{tpu_custom_call.1} parent=32 // pred_region
            %154 = sst [smem:[#allocation14]] [#allocation13]
            %155 = sst [smem:[#allocation15]] [#allocation12]
          $region39: #{tpu_custom_call.1} parent=32 // pred_fallthru
            _
          %157 = shalt.err (0)
          %s159 = sshll.u32 %s150, 4
          %s160 = int_to_ptr.vmem [resolvable:$true] %s159
          %162 = dma.hbm_to_vmem [thread:$0]  %s149, 16, %s160, %s151
        $region33: #{tpu_custom_call.1} parent=23 // loop_footer
          %s138 = sadd.s32 1, %s134
        $region34: #{tpu_custom_call.1} parent=23 // loop_footer_branch
          %133 = sbr.rel target = $region30
        $region35: #{tpu_custom_call.1} parent=23 // loop_exit
          _
        loop: start=0, step=1, limit=8
        $region40: #{tpu_custom_call.1} parent=23 // loop_pre_header
          _
        $region41: #{tpu_custom_call.1} parent=23 // loop_header
          %s164 = sphi 0, %s168
          %p165 = scmp.ge.s32.totalorder %s164, 8
        $region42: #{tpu_custom_call.1} parent=23 // loop_header_branch
          %167 = sbr.rel (%p165) target = $region46
        $region43: #{tpu_custom_call.1} parent=23 // loop_body
          %s169 = scalar_lea.sflag [#allocation3], %s164
          %s170 = smul.u32 1, 1
          %s171 = sshll.u32 %s170, 4
          %172 = dma.done %s169, %s171
        $region44: #{tpu_custom_call.1} parent=23 // loop_footer
          %s168 = sadd.s32 1, %s164
        $region45: #{tpu_custom_call.1} parent=23 // loop_footer_branch
          %163 = sbr.rel target = $region41
        $region46: #{tpu_custom_call.1} parent=23 // loop_exit
          _
        %v173 = vld [vmem:[#allocation2] sm:$0xff]
        %174 = vst [vmem:[%s131] sm:$0xff] %v173
        %p175 = scmp.eq.s32.totalorder %s31, 0
        // Predicated region
        $region47: #{tpu_custom_call.1} parent=23 // pred_check
          %p176 = pneg %p175
        $region48: #{tpu_custom_call.1} parent=23 // pred_check_branch
          %178 = sbr.rel (%p176) target = $region50
        $region49: #{tpu_custom_call.1} parent=23 // pred_region
          %s179 = scalar_lea.smem [#allocation4], 0
          %180 = sst [smem:[%s179]] 0
        $region50: #{tpu_custom_call.1} parent=23 // pred_fallthru
          _
        %s181 = sld [smem:[#allocation6]]
        %p182 = scmp.ne.s32.totalorder %s181, 0
        // Predicated region
        $region51: #{tpu_custom_call.1} parent=23 // pred_check
          %p183 = pneg %p182
        $region52: #{tpu_custom_call.1} parent=23 // pred_check_branch
          %185 = sbr.rel (%p183) target = $region54
        $region53: #{tpu_custom_call.1} parent=23 // pred_region
          loop: start=0, step=1, limit=8
          $region55: #{tpu_custom_call.1} parent=53 // loop_pre_header
            _
          $region56: #{tpu_custom_call.1} parent=53 // loop_header
            %s187 = sphi 0, %s191
            %p188 = scmp.ge.s32.totalorder %s187, 8
          $region57: #{tpu_custom_call.1} parent=53 // loop_header_branch
            %190 = sbr.rel (%p188) target = $region61
          $region58: #{tpu_custom_call.1} parent=53 // loop_body
            %s192 = sadd.s32 %s132, %s187
            %s193 = sshra.s32 %s192, 7
            %s194 = sand.u32 %s192, 127
            %s195 = sadd.s32 %s193, %s30
            %s196 = smul.u32 %s195, 128
            %s197 = sshra.s32 %s192, 7
            %s198 = sand.u32 %s192, 127
            %s199 = sadd.s32 %s196, %s198
            %s200 = sld [smem:[#allocation7 + %s199]]
            %p201 = scmp.eq.s32.totalorder %s200, 511
            %s202 = sld [smem:[#allocation4]]
            %p203 = scmp.lt.s32.totalorder %s202, 8
            %p204 = pnand %p201, %p203
            %p205 = pneg %p204
            // Predicated region
            $region62: #{tpu_custom_call.1} parent=58 // pred_check
              _
            $region63: #{tpu_custom_call.1} parent=58 // pred_check_branch
              %207 = sbr.rel (%p204) target = $region65
            $region64: #{tpu_custom_call.1} parent=58 // pred_region
              %s208 = scalar_lea.vmem [#allocation8], %s202
              %v209 = vld [vmem:[%s208] sm:$0x1]
              %s210 = scalar_lea.vmem %s131, %s187 [#allocation11]
              %211 = vst [vmem:[%s210] sm:$0x1] %v209
            $region65: #{tpu_custom_call.1} parent=58 // pred_fallthru
              _
            %s212 = scalar_select %p201, 1, 0
            %s213 = sadd.s32 %s202, %s212
            %s214 = scalar_lea.smem [#allocation4], 0
            %215 = sst [smem:[%s214]] %s213
          $region59: #{tpu_custom_call.1} parent=53 // loop_footer
            %s191 = sadd.s32 1, %s187
          $region60: #{tpu_custom_call.1} parent=53 // loop_footer_branch
            %186 = sbr.rel target = $region56
          $region61: #{tpu_custom_call.1} parent=53 // loop_exit
            _
        $region54: #{tpu_custom_call.1} parent=23 // pred_fallthru
          _
        %s216 = sand.u32 %s69, 1
        %s217 = scalar_lea.sflag [#allocation10], %s216
        %s218 = sand.u32 %s69, 1
        %s219 = smul.addr %s218, 8
        %s220 = scalar_lea.vmem [#allocation11], %s219
        // Predicated region
        $region66: #{tpu_custom_call.1} parent=23 // pred_check
          %p221 = pneg %p79
        $region67: #{tpu_custom_call.1} parent=23 // pred_check_branch
          %223 = sbr.rel (%p221) target = $region69
        $region68: #{tpu_custom_call.1} parent=23 // pred_region
          %s225 = ssub.s32 128, 128
          %226 = vsyncadd %s217, %s225
          %s227 = smul.addr %s30, 2
          %s228 = sadd.s32 %s31, %s227
          %s229 = smul.addr %s228, 128
          %s230 = scalar_lea.hbm %s4, %s229
          %s232 = sshll.u32 %s220, 4
          %s233 = int_to_ptr.vmem [resolvable:$true] %s232
          %235 = dma.vmem_to_hbm [thread:$0]  %s233, 128, %s230, %s217
        $region69: #{tpu_custom_call.1} parent=23 // pred_fallthru
          _
      $region24: #{tpu_custom_call.1} parent=5 // pred_fallthru
        _
      %p236 = scmp.le.s32.totalorder 2, %s21
      // Predicated region
      $region70: #{tpu_custom_call.1} parent=5 // pred_check
        %p237 = pneg %p236
      $region71: #{tpu_custom_call.1} parent=5 // pred_check_branch
        %239 = sbr.rel (%p237) target = $region73
      $region72: #{tpu_custom_call.1} parent=5 // pred_region
        %s240 = ssub.s32 %s21, 2
        // Predicated region
        $region74: #{tpu_custom_call.1} parent=72 // pred_check
          %p241 = pneg %p85
        $region75: #{tpu_custom_call.1} parent=72 // pred_check_branch
          %243 = sbr.rel (%p241) target = $region77
        $region76: #{tpu_custom_call.1} parent=72 // pred_region
          %s244 = sand.u32 %s70, 1
          %s245 = scalar_lea.sflag [#allocation10], %s244
          %s246 = sand.u32 %s70, 1
          %s247 = smul.addr %s246, 8
          %s248 = scalar_lea.vmem [#allocation11], %s247
          %249 = dma.done %s245, 128
        $region77: #{tpu_custom_call.1} parent=72 // pred_fallthru
          _
      $region73: #{tpu_custom_call.1} parent=5 // pred_fallthru
        _
    $region6: #{tpu_custom_call.1} parent=1 // loop_footer
      %s25 = sadd.s32 1, %s21
    $region7: #{tpu_custom_call.1} parent=1 // loop_footer_branch
      %20 = sbr.rel target = $region3
    $region8: #{tpu_custom_call.1} parent=1 // loop_exit
      _
    %250 = vsyncpa [#allocation9], 1
    %s251 = scalar_lea.sflag [#allocation9], 1
    %252 = vsyncpa %s251, 1
    %253 = vsyncpa [#allocation10], 1
    %s254 = scalar_lea.sflag [#allocation10], 1
    %255 = vsyncpa %s254, 1
  %256 = vsyncmov [#allocation3]
  %s257 = vpop.sfrf %256
  %p258 = scmp.eq.s32.totalorder %s257, 0
  %p259 = pneg %p258
  %261 = shalt.err (%p259)
  %s262 = scalar_lea.sflag [#allocation3], 1
  %263 = vsyncmov %s262
  %s264 = vpop.sfrf %263
  %p265 = scmp.eq.s32.totalorder %s264, 0
  %p266 = pneg %p265
  %268 = shalt.err (%p266)
  %s269 = scalar_lea.sflag [#allocation3], 2
  %270 = vsyncmov %s269
  %s271 = vpop.sfrf %270
  %p272 = scmp.eq.s32.totalorder %s271, 0
  %p273 = pneg %p272
  %275 = shalt.err (%p273)
  %s276 = scalar_lea.sflag [#allocation3], 3
  %277 = vsyncmov %s276
  %s278 = vpop.sfrf %277
  %p279 = scmp.eq.s32.totalorder %s278, 0
  %p280 = pneg %p279
  %282 = shalt.err (%p280)
  %s283 = scalar_lea.sflag [#allocation3], 4
  %284 = vsyncmov %s283
  %s285 = vpop.sfrf %284
  %p286 = scmp.eq.s32.totalorder %s285, 0
  %p287 = pneg %p286
  %289 = shalt.err (%p287)
  %s290 = scalar_lea.sflag [#allocation3], 5
  %291 = vsyncmov %s290
  %s292 = vpop.sfrf %291
  %p293 = scmp.eq.s32.totalorder %s292, 0
  %p294 = pneg %p293
  %296 = shalt.err (%p294)
  %s297 = scalar_lea.sflag [#allocation3], 6
  %298 = vsyncmov %s297
  %s299 = vpop.sfrf %298
  %p300 = scmp.eq.s32.totalorder %s299, 0
  %p301 = pneg %p300
  %303 = shalt.err (%p301)
  %s304 = scalar_lea.sflag [#allocation3], 7
  %305 = vsyncmov %s304
  %s306 = vpop.sfrf %305
  %p307 = scmp.eq.s32.totalorder %s306, 0
  %p308 = pneg %p307
  %310 = shalt.err (%p308)

</llo_original>
